<compile_context>
chip_gen: v7x
topology: tpu7x:2x2x1
jax: 0.10.0
libtpu: 0.0.40
codegen_flags: <defaults>
</compile_context>

<pallas_src>
import functools

import jax
import jax.numpy as jnp
from jax.experimental import pallas as pl
from jax.experimental.pallas import tpu as pltpu


def _round_up(x, m):
    return ((x + m - 1) // m) * m


def _inverse_wht_matrix(dtype=jnp.float32):
    h4 = jnp.array([[1, 1, 1, 1],
                    [1, -1, 1, -1],
                    [1, 1, -1, -1],
                    [1, -1, -1, 1]], dtype=dtype)
    return jnp.kron(h4, h4) / 16.0  # (16, 16): T[4i+j, 4u+v] = H[i,u]H[j,v]/16


def _iwht2_kernel(x_ref, w_ref, b_ref, o_ref):
    """Single dense MXU matmul + bias add.

    x_ref: (tile_n, 16*C_pad)      WHT-domain activations, (t, c) flattened on lanes
    w_ref: (16*C_pad, 16*K_pad)    folded (inverse-WHT x channel-mix) weight
    b_ref: (1, 16*K_pad)           bias pre-tiled over the 16 spatial positions
    o_ref: (tile_n, 16*K_pad)      (i, j, k) flattened on lanes
    """
    acc = jnp.dot(x_ref[...], w_ref[...], preferred_element_type=jnp.float32)
    o_ref[...] = (acc + b_ref[...]).astype(o_ref.dtype)


def _choose_tile(n, tile_n):
    # Keep >= 2 grid steps when possible (v7x has 2 TensorCores), sublane-align to 16
    # (also valid for bf16 packing), cap by the requested tile size.
    half = _round_up((n + 1) // 2, 16)
    return max(16, min(tile_n, half))


@functools.partial(jax.jit, static_argnames=("tile_n", "compute_dtype"))
def iwht2_branch(trans_im, weight, bias, *, tile_n=256, compute_dtype=jnp.float32):
    """One branch of IWHT2Layer.forward.

    trans_im: (16, B, nH, nW, C), weight: (16, C, K), bias: (1, 1, 1, K)
    returns:  (B, 4*nH, 4*nW, K)
    """
    s, b, n_h, n_w, c = trans_im.shape
    assert s == 16
    k = weight.shape[2]
    n = b * n_h * n_w
    out_dtype = trans_im.dtype

    # Padded sizes: contraction dim 16*c_pad and lane dim 16*k_pad become
    # multiples of 128.
    c_pad = _round_up(c, 8)
    k_pad = _round_up(k, 8)
    tile = _choose_tile(n, tile_n)
    n_pad = _round_up(n, tile)

    # ---- activations: (16, N, C) -> (N_pad, 16*C_pad), f32/bf16 ----
    x = trans_im.reshape(16, n, c).astype(jnp.float32)
    x = jnp.pad(x, ((0, 0), (0, 0), (0, c_pad - c)))
    x = x.transpose(1, 0, 2).reshape(n, 16 * c_pad)
    x = jnp.pad(x, ((0, n_pad - n), (0, 0))).astype(compute_dtype)

    # ---- folded weight: Wf[(t,c),(p,k)] = T[p,t] * w[t,c,k] ----
    t_mat = _inverse_wht_matrix(jnp.float32)                       # (16, 16) = [p, t]
    w_p = jnp.pad(weight.astype(jnp.float32),
                  ((0, 0), (0, c_pad - c), (0, k_pad - k)))        # (16, C_pad, K_pad)
    w_folded = jnp.einsum("pt,tck->tcpk", t_mat, w_p)
    w_folded = w_folded.reshape(16 * c_pad, 16 * k_pad).astype(compute_dtype)

    # ---- bias: (1, 1, 1, K) -> (1, 16*K_pad), pre-tiled over spatial positions ----
    b_vec = jnp.pad(bias.reshape(k).astype(jnp.float32), (0, k_pad - k))
    b_row = jnp.tile(b_vec, 16).reshape(1, 16 * k_pad)

    out = pl.pallas_call(
        _iwht2_kernel,
        out_shape=jax.ShapeDtypeStruct((n_pad, 16 * k_pad), out_dtype),
        grid_spec=pltpu.PrefetchScalarGridSpec(
            num_scalar_prefetch=0,
            grid=(n_pad // tile,),
            in_specs=[
                pl.BlockSpec((tile, 16 * c_pad), lambda i: (i, 0)),      # x
                pl.BlockSpec((16 * c_pad, 16 * k_pad), lambda i: (0, 0)),  # folded W
                pl.BlockSpec((1, 16 * k_pad), lambda i: (0, 0)),         # bias row
            ],
            out_specs=pl.BlockSpec((tile, 16 * k_pad), lambda i: (i, 0)),
        ),
        compiler_params=pltpu.CompilerParams(
            dimension_semantics=("parallel",),
            vmem_limit_bytes=48 * 1024 * 1024,
        ),
    )(x, w_folded, b_row)

    # (N_pad, 16*K_pad) -> (B, nH, nW, 4, 4, K) -> (B, nH, 4, nW, 4, K) -> NHWC
    y = out[:n].reshape(b, n_h, n_w, 4, 4, k_pad)[..., :k]
    y = y.transpose(0, 1, 3, 2, 4, 5).reshape(b, 4 * n_h, 4 * n_w, k)
    return y


class IWHT2LayerPallas:
    """JAX/Pallas equivalent of the PyTorch IWHT2Layer."""

    def __init__(self, in_channels, out_channels, bias=True, key=None,
                 compute_dtype=jnp.float32):
        self.in_channels = in_channels
        self.out_channels = out_channels
        self.compute_dtype = compute_dtype
        k1 = out_channels // 2
        k2 = out_channels // 2 + out_channels % 2
        key = jax.random.PRNGKey(0) if key is None else key
        ks = jax.random.split(key, 4)
        scale = 1.0 / jnp.sqrt(jnp.float32(in_channels))
        self.weight1 = (jax.random.normal(ks[0], (16, in_channels, k1),
                                          jnp.float32) * scale)
        self.weight2 = (jax.random.normal(ks[1], (16, in_channels, k2),
                                          jnp.float32) * scale)
        self.bias_flag = bias
        if bias:
            self.bias1 = jax.random.normal(ks[2], (1, 1, 1, k1), jnp.float32) * 0.1
            self.bias2 = jax.random.normal(ks[3], (1, 1, 1, k2), jnp.float32) * 0.1
        else:
            self.bias1 = jnp.zeros((1, 1, 1, k1), jnp.float32)
            self.bias2 = jnp.zeros((1, 1, 1, k2), jnp.float32)

    def __call__(self, trans_im1, trans_im2):
        out1 = iwht2_branch(trans_im1, self.weight1, self.bias1,
                            compute_dtype=self.compute_dtype)
        out2 = iwht2_branch(trans_im2, self.weight2, self.bias2,
                            compute_dtype=self.compute_dtype)
        return out1, out2


def _reference_branch(trans_im, weight, bias):
    """Pure-JAX reference for correctness checking."""
    s, b, n_h, n_w, c = trans_im.shape
    k = weight.shape[2]
    t_mat = _inverse_wht_matrix(trans_im.dtype)
    m = jnp.einsum("tbhwc,tck->tbhwk", trans_im, weight)
    y = jnp.einsum("pt,tbhwk->pbhwk", t_mat, m)
    y = y.reshape(4, 4, b, n_h, n_w, k).transpose(2, 3, 0, 4, 1, 5)
    y = y.reshape(b, 4 * n_h, 4 * n_w, k)
    return y + bias.reshape(1, 1, 1, k)


if __name__ == "__main__":
    key = jax.random.PRNGKey(0)
    k_in1, k_in2, k_param = jax.random.split(key, 3)

    B, nH, nW = 2, 4, 4
    in_channels, out_channels = 8, 6

    trans_im1 = jax.random.normal(k_in1, (16, B, nH, nW, in_channels), jnp.float32)
    trans_im2 = jax.random.normal(k_in2, (16, B, nH, nW, in_channels), jnp.float32)

    # ---- f32 accuracy-reference path ----
    layer = IWHT2LayerPallas(in_channels, out_channels, bias=True, key=k_param,
                             compute_dtype=jnp.float32)
    out1, out2 = layer(trans_im1, trans_im2)
    out1 = jax.block_until_ready(out1)
    out2 = jax.block_until_ready(out2)

    assert out1.shape == (B, 4 * nH, 4 * nW, out_channels // 2)
    assert out2.shape == (B, 4 * nH, 4 * nW,
                          out_channels // 2 + out_channels % 2)

    ref1 = _reference_branch(trans_im1, layer.weight1, layer.bias1)
    ref2 = _reference_branch(trans_im2, layer.weight2, layer.bias2)
    assert jnp.allclose(out1, ref1, atol=1e-5, rtol=1e-5)
    assert jnp.allclose(out2, ref2, atol=1e-5, rtol=1e-5)

    # ---- bf16 MXU path (v6e/v7x): relaxed tolerance ----
    layer_bf16 = IWHT2LayerPallas(in_channels, out_channels, bias=True, key=k_param,
                                  compute_dtype=jnp.bfloat16)
    b1, b2 = layer_bf16(trans_im1, trans_im2)
    b1 = jax.block_until_ready(b1)
    b2 = jax.block_until_ready(b2)
    assert jnp.allclose(b1, ref1, atol=1e-1, rtol=1e-1)
    assert jnp.allclose(b2, ref2, atol=1e-1, rtol=1e-1)

    print("KERNEL_OK")
</pallas_src>

<mosaic_0001>
module attributes {stable_mosaic.version = 11 : i64} {
  func.func @_iwht2_kernel(%arg0: i32, %arg1: memref<16x128xf32, #tpu.memory_space<vmem>>, %arg2: memref<128x128xf32, #tpu.memory_space<vmem>>, %arg3: memref<1x128xf32, #tpu.memory_space<vmem>>, %arg4: memref<16x128xf32, #tpu.memory_space<vmem>>) attributes {dimension_semantics = [#tpu.dimension_semantics<parallel>], iteration_bounds = array<i64: 2>, scalar_prefetch = 0 : i64, scratch_operands = 0 : i64, tpu.core_type = #tpu.core_type<tc>, window_params = [{transform_indices = @transform_0, window_bounds = array<i64: 16, 128>}, {pipeline_mode = #tpu.pipeline_mode<synchronous>, transform_indices = @transform_1, window_bounds = array<i64: 128, 128>}, {pipeline_mode = #tpu.pipeline_mode<synchronous>, transform_indices = @transform_2, window_bounds = array<i64: 1, 128>}, {transform_indices = @transform_3, window_bounds = array<i64: 16, 128>}]} {
    %c0 = arith.constant 0 : index
    %c0_0 = arith.constant 0 : index
    %0 = vector.load %arg1[%c0, %c0_0] : memref<16x128xf32, #tpu.memory_space<vmem>>, vector<16x128xf32>
    %c0_1 = arith.constant 0 : index
    %c0_2 = arith.constant 0 : index
    %1 = vector.load %arg2[%c0_1, %c0_2] : memref<128x128xf32, #tpu.memory_space<vmem>>, vector<128x128xf32>
    %cst = arith.constant dense<0.000000e+00> : vector<16x128xf32>
    %2 = tpu.matmul %0, %1, %cst {dimension_numbers = #tpu.dot_dimension_numbers<[1], [0], [0], [1], [0, 0, 1, 1], [], []>} : vector<16x128xf32>, vector<128x128xf32>, vector<16x128xf32> -> vector<16x128xf32>
    %c0_3 = arith.constant 0 : index
    %c0_4 = arith.constant 0 : index
    %3 = vector.load %arg3[%c0_3, %c0_4] : memref<1x128xf32, #tpu.memory_space<vmem>>, vector<1x128xf32>
    %4 = vector.broadcast %3 : vector<1x128xf32> to vector<16x128xf32>
    %5 = arith.addf %2, %4 : vector<16x128xf32>
    %c0_5 = arith.constant 0 : index
    %c0_6 = arith.constant 0 : index
    %6 = vector.load %arg4[%c0_5, %c0_6] : memref<16x128xf32, #tpu.memory_space<vmem>>, vector<16x128xf32>
    tpu.vector_store %arg4[%c0_5, %c0_6], %5 {strides = array<i32>} : memref<16x128xf32, #tpu.memory_space<vmem>>, vector<16x128xf32>,
    return
  }
  func.func @transform_0(%arg0: i32) -> (i32, i32) {
    %c0_i32 = arith.constant 0 : i32
    %c0_i32_0 = arith.constant 0 : i32
    return %arg0, %c0_i32 : i32, i32
  }
  func.func @transform_1(%arg0: i32) -> (i32, i32) {
    %c0_i32 = arith.constant 0 : i32
    %c0_i32_0 = arith.constant 0 : i32
    %c0_i32_1 = arith.constant 0 : i32
    return %c0_i32, %c0_i32_0 : i32, i32
  }
  func.func @transform_2(%arg0: i32) -> (i32, i32) {
    %c0_i32 = arith.constant 0 : i32
    %c0_i32_0 = arith.constant 0 : i32
    %c0_i32_1 = arith.constant 0 : i32
    return %c0_i32, %c0_i32_0 : i32, i32
  }
  func.func @transform_3(%arg0: i32) -> (i32, i32) {
    %c0_i32 = arith.constant 0 : i32
    %c0_i32_0 = arith.constant 0 : i32
    return %arg0, %c0_i32 : i32, i32
  }
}

</mosaic_0001>

<llo_original>
// kernel: tile.8
$region0: #{tile.8}
  #allocation0 [shape = 's32[1]{0}', space=sflag, size = 0x4, scoped, tag = 'scoped memory for tile.8']
  %s0 = inlined_call_operand.vmem [shape: f32[8], index: 0, kind: input, shape index: {}]
  %s1 = inlined_call_operand.vmem [shape: f32[16,8], index: 1, kind: output, shape index: {}]
  // Predicated region
  $region2: #{tile.8} parent=0 // pred_check
    _
  $region3: #{tile.8} parent=0 // pred_check_branch
    %3 = sbr.rel (0) target = $region5
  $region4: #{tile.8} parent=0 // pred_region
    _
  $region5: #{tile.8} parent=0 // pred_fallthru
    _
  %v4 = vld [vmem:[%s0] ss:$0 sm:$0xff]
  %5 = vst [vmem:[%s1] sm:$0xff] %v4
  %s6 = scalar_lea.vmem %s1, 8
  %7 = vst [vmem:[%s6] sm:$0xff] %v4

// kernel: tile.9
$region0: #{tile.9}
  %s0 = inlined_call_operand.vmem [shape: f32[16,8], index: 0, kind: input, shape index: {}]
  %s1 = inlined_call_operand.vmem [shape: f32[1,128], index: 1, kind: output, shape index: {}]
  $region1: #{tile.9} parent=0
    #allocation0 [shape = 'u8[4096]{0}', space=vmem, size = 0x1000, scoped, tag = 'scoped mem for output reshape']
    %v2 = vld [vmem:[%s0] sm:$0x1]
    %vm3 = vcmask 64512
    %4 = vst.msk [vmem:[#allocation0] sm:$0x1] %vm3, %v2
    %s5 = scalar_lea.vmem %s0, 15
    %v6 = vld [vmem:[%s5] sm:$0x1]
    %7 = vrot.lane.b32.xlu0 %v6, 120
    %v8 = vpop.permute.xlu0 %7
    %vm9 = vcmask 1048512
    %10 = vst.msk [vmem:[#allocation0] sm:$0x1] %vm9, %v8
    %s11 = scalar_lea.vmem %s0, 14
    %v12 = vld [vmem:[%s11] sm:$0x1]
    %13 = vrot.lane.b32.xlu0 %v12, 112
    %v14 = vpop.permute.xlu0 %13
    %vm15 = vcmask 982912
    %16 = vst.msk [vmem:[#allocation0] sm:$0x1] %vm15, %v14
    %s17 = scalar_lea.vmem %s0, 13
    %v18 = vld [vmem:[%s17] sm:$0x1]
    %19 = vrot.lane.b32.xlu0 %v18, 104
    %v20 = vpop.permute.xlu0 %19
    %vm21 = vcmask 917312
    %22 = vst.msk [vmem:[#allocation0] sm:$0x1] %vm21, %v20
    %s23 = scalar_lea.vmem %s0, 12
    %v24 = vld [vmem:[%s23] sm:$0x1]
    %25 = vrot.lane.b32.xlu0 %v24, 96
    %v26 = vpop.permute.xlu0 %25
    %vm27 = vcmask 851712
    %28 = vst.msk [vmem:[#allocation0] sm:$0x1] %vm27, %v26
    %s29 = scalar_lea.vmem %s0, 11
    %v30 = vld [vmem:[%s29] sm:$0x1]
    %31 = vrot.lane.b32.xlu0 %v30, 88
    %v32 = vpop.permute.xlu0 %31
    %vm33 = vcmask 786112
    %34 = vst.msk [vmem:[#allocation0] sm:$0x1] %vm33, %v32
    %s35 = scalar_lea.vmem %s0, 10
    %v36 = vld [vmem:[%s35] sm:$0x1]
    %37 = vrot.lane.b32.xlu0 %v36, 80
    %v38 = vpop.permute.xlu0 %37
    %vm39 = vcmask 720512
    %40 = vst.msk [vmem:[#allocation0] sm:$0x1] %vm39, %v38
    %s41 = scalar_lea.vmem %s0, 9
    %v42 = vld [vmem:[%s41] sm:$0x1]
    %43 = vrot.lane.b32.xlu0 %v42, 72
    %v44 = vpop.permute.xlu0 %43
    %vm45 = vcmask 654912
    %46 = vst.msk [vmem:[#allocation0] sm:$0x1] %vm45, %v44
    %s47 = scalar_lea.vmem %s0, 8
    %v48 = vld [vmem:[%s47] sm:$0x1]
    %49 = vrot.lane.b32.xlu0 %v48, 64
    %v50 = vpop.permute.xlu0 %49
    %vm51 = vcmask 589312
    %52 = vst.msk [vmem:[#allocation0] sm:$0x1] %vm51, %v50
    %s53 = scalar_lea.vmem %s0, 7
    %v54 = vld [vmem:[%s53] sm:$0x1]
    %55 = vrot.lane.b32.xlu0 %v54, 56
    %v56 = vpop.permute.xlu0 %55
    %vm57 = vcmask 523712
    %58 = vst.msk [vmem:[#allocation0] sm:$0x1] %vm57, %v56
    %s59 = scalar_lea.vmem %s0, 6
    %v60 = vld [vmem:[%s59] sm:$0x1]
    %61 = vrot.lane.b32.xlu0 %v60, 48
    %v62 = vpop.permute.xlu0 %61
    %vm63 = vcmask 458112
    %64 = vst.msk [vmem:[#allocation0] sm:$0x1] %vm63, %v62
    %s65 = scalar_lea.vmem %s0, 5
    %v66 = vld [vmem:[%s65] sm:$0x1]
    %67 = vrot.lane.b32.xlu0 %v66, 40
    %v68 = vpop.permute.xlu0 %67
    %vm69 = vcmask 392512
    %70 = vst.msk [vmem:[#allocation0] sm:$0x1] %vm69, %v68
    %s71 = scalar_lea.vmem %s0, 4
    %v72 = vld [vmem:[%s71] sm:$0x1]
    %73 = vrot.lane.b32.xlu0 %v72, 32
    %v74 = vpop.permute.xlu0 %73
    %vm75 = vcmask 326912
    %76 = vst.msk [vmem:[#allocation0] sm:$0x1] %vm75, %v74
    %s77 = scalar_lea.vmem %s0, 3
    %v78 = vld [vmem:[%s77] sm:$0x1]
    %79 = vrot.lane.b32.xlu0 %v78, 24
    %v80 = vpop.permute.xlu0 %79
    %vm81 = vcmask 261312
    %82 = vst.msk [vmem:[#allocation0] sm:$0x1] %vm81, %v80
    %s83 = scalar_lea.vmem %s0, 2
    %v84 = vld [vmem:[%s83] sm:$0x1]
    %85 = vrot.lane.b32.xlu0 %v84, 16
    %v86 = vpop.permute.xlu0 %85
    %vm87 = vcmask 195712
    %88 = vst.msk [vmem:[#allocation0] sm:$0x1] %vm87, %v86
    %s89 = scalar_lea.vmem %s0, 1
    %v90 = vld [vmem:[%s89] sm:$0x1]
    %91 = vrot.lane.b32.xlu0 %v90, 8
    %v92 = vpop.permute.xlu0 %91
    %vm93 = vcmask 130112
    %94 = vst.msk [vmem:[#allocation0] sm:$0x1] %vm93, %v92
    %s96 = sshllo.u32 0, 1
    %v98 = vld [vmem:[#allocation0] sm:%s96]
    %s99 = sshllo.u32 0, 1
    %100 = vst [vmem:[%s1] sm:%s99] %v98

// kernel: iwht2_branch.1
$region0: #{iwht2_branch.1}
  #allocation0 [shape = 'u32[]', space=smem, size = 0x4, offset = 0x4, fixed_abs, tag = 'smem constant byte address 0x4 - core index']
  #allocation1 [shape = 'u32[144,128]{1,0:T(1,128)}', space=vmem, size = 0x12000, scoped, tag = 'internal scratch']
  %s0 = inlined_call_operand.vmem [shape: f32[32,128], index: 0, kind: input, shape index: {}]
  %s1 = inlined_call_operand.vmem [shape: f32[128,128], index: 1, kind: input, shape index: {}]
  %s2 = inlined_call_operand.vmem [shape: f32[1,128], index: 2, kind: input, shape index: {}]
  %s3 = inlined_call_operand.vmem [shape: f32[32,128], index: 3, kind: output, shape index: {}]
  %s4 = sld [smem:[#allocation0]]
  $region45: #{iwht2_branch.1} parent=0
    _
  %s6 = ssub.s32 1, %s4
  %s7 = scalar_select 0, %s6, %s4
  loop: start=0, step=1, limit=4
  $region2: #{iwht2_branch.1} parent=0 // loop_pre_header
    _
  $region3: #{iwht2_branch.1} parent=0 // loop_header
    %s9 = sphi 0, %s13
    %p10 = scmp.ge.s32.totalorder %s9, 4
    %s19 = sphi 0, %s21
    %s22 = sphi 0, %s19
    %s23 = sphi 0, %s22
    %s39 = sphi 0, %s23
    %s43 = sphi 0, %s43
    %s45 = sphi 0, %s43
    %s46 = sphi 0, %s45
    %s60 = sphi 0, %s46
    %s64 = sphi 0, %s64
    %s66 = sphi 0, %s64
    %s67 = sphi 0, %s66
    %s81 = sphi 0, %s67
    %s87 = sphi 0, %s89
    %s90 = sphi 0, %s87
    %s91 = sphi 0, %s90
    %s107 = sphi 0, %s91
  $region4: #{iwht2_branch.1} parent=0 // loop_header_branch
    %12 = sbr.rel (%p10) target = $region8
  $region5: #{iwht2_branch.1} parent=0 // loop_body
    %s14 = ssub.s32 %s9, 1
    %s15 = ssub.s32 %s9, 2
    %s16 = sadd.s32 %s9, 1
    %s17 = ssub.s32 %s9, %s16
    %p18 = scmp.eq.s32.totalorder %s17, 0
    %s20 = sadd.s32 %s19, 1
    %s21 = scalar_select %p18, %s19, %s20
    %p24 = pneg %p18
    %p25 = scmp.eq.s32.totalorder %s9, 1
    %p26 = por %p24, %p25
    %p27 = scmp.ne.s32.totalorder %s19, %s22
    %p28 = scmp.eq.s32.totalorder %s9, 0
    %p29 = por %p27, %p28
    %p30 = scmp.ne.s32.totalorder %s19, %s22
    %p31 = scmp.eq.s32.totalorder %s14, 1
    %p32 = por %p30, %p31
    %p33 = scmp.ne.s32.totalorder %s22, %s23
    %p34 = scmp.eq.s32.totalorder %s14, 0
    %p35 = por %p33, %p34
    %p36 = scmp.ne.s32.totalorder %s22, %s23
    %p37 = scmp.eq.s32.totalorder %s15, 1
    %p38 = por %p36, %p37
    %p40 = scmp.ne.s32.totalorder %s23, %s39
    %p41 = scmp.eq.s32.totalorder %s15, 0
    %p42 = por %p40, %p41
    %s44 = sadd.s32 %s43, 1
    %p47 = scmp.eq.s32.totalorder %s9, 1
    %p48 = scmp.ne.s32.totalorder %s43, %s45
    %p49 = scmp.eq.s32.totalorder %s9, 0
    %p50 = por %p48, %p49
    %p51 = scmp.ne.s32.totalorder %s43, %s45
    %p52 = scmp.eq.s32.totalorder %s14, 1
    %p53 = por %p51, %p52
    %p54 = scmp.ne.s32.totalorder %s45, %s46
    %p55 = scmp.eq.s32.totalorder %s14, 0
    %p56 = por %p54, %p55
    %p57 = scmp.ne.s32.totalorder %s45, %s46
    %p58 = scmp.eq.s32.totalorder %s15, 1
    %p59 = por %p57, %p58
    %p61 = scmp.ne.s32.totalorder %s46, %s60
    %p62 = scmp.eq.s32.totalorder %s15, 0
    %p63 = por %p61, %p62
    %s65 = sadd.s32 %s64, 1
    %p68 = scmp.eq.s32.totalorder %s9, 1
    %p69 = scmp.ne.s32.totalorder %s64, %s66
    %p70 = scmp.eq.s32.totalorder %s9, 0
    %p71 = por %p69, %p70
    %p72 = scmp.ne.s32.totalorder %s64, %s66
    %p73 = scmp.eq.s32.totalorder %s14, 1
    %p74 = por %p72, %p73
    %p75 = scmp.ne.s32.totalorder %s66, %s67
    %p76 = scmp.eq.s32.totalorder %s14, 0
    %p77 = por %p75, %p76
    %p78 = scmp.ne.s32.totalorder %s66, %s67
    %p79 = scmp.eq.s32.totalorder %s15, 1
    %p80 = por %p78, %p79
    %p82 = scmp.ne.s32.totalorder %s67, %s81
    %p83 = scmp.eq.s32.totalorder %s15, 0
    %p84 = por %p82, %p83
    %s85 = ssub.s32 %s9, %s16
    %p86 = scmp.eq.s32.totalorder %s85, 0
    %s88 = sadd.s32 %s87, 1
    %s89 = scalar_select %p86, %s87, %s88
    %p92 = pneg %p86
    %p93 = scmp.eq.s32.totalorder %s9, 1
    %p94 = por %p92, %p93
    %p95 = scmp.ne.s32.totalorder %s87, %s90
    %p96 = scmp.eq.s32.totalorder %s9, 0
    %p97 = por %p95, %p96
    %p98 = scmp.ne.s32.totalorder %s87, %s90
    %p99 = scmp.eq.s32.totalorder %s14, 1
    %p100 = por %p98, %p99
    %p101 = scmp.ne.s32.totalorder %s90, %s91
    %p102 = scmp.eq.s32.totalorder %s14, 0
    %p103 = por %p101, %p102
    %p104 = scmp.ne.s32.totalorder %s90, %s91
    %p105 = scmp.eq.s32.totalorder %s15, 1
    %p106 = por %p104, %p105
    %p108 = scmp.ne.s32.totalorder %s91, %s107
    %p109 = scmp.eq.s32.totalorder %s15, 0
    %p110 = por %p108, %p109
    %p111 = scmp.le.s32.totalorder 1, %s9
    %p112 = scmp.lt.s32.totalorder %s9, 3
    %p113 = pnand %p111, %p112
    %p114 = pneg %p113
    // Predicated region
    $region9: #{iwht2_branch.1} parent=5 // pred_check
      _
    $region10: #{iwht2_branch.1} parent=5 // pred_check_branch
      %116 = sbr.rel (%p113) target = $region12
    $region11: #{iwht2_branch.1} parent=5 // pred_region
      %s117 = ssub.s32 %s9, 1
      // Predicated region
      $region13: #{iwht2_branch.1} parent=11 // pred_check
        %p118 = pneg %p56
      $region14: #{iwht2_branch.1} parent=11 // pred_check_branch
        %120 = sbr.rel (%p118) target = $region16
      $region15: #{iwht2_branch.1} parent=11 // pred_region
        _
      $region16: #{iwht2_branch.1} parent=11 // pred_fallthru
        _
      // Predicated region
      $region17: #{iwht2_branch.1} parent=11 // pred_check
        %p121 = pneg %p77
      $region18: #{iwht2_branch.1} parent=11 // pred_check_branch
        %123 = sbr.rel (%p121) target = $region20
      $region19: #{iwht2_branch.1} parent=11 // pred_region
        _
      $region20: #{iwht2_branch.1} parent=11 // pred_fallthru
        _
    $region12: #{iwht2_branch.1} parent=5 // pred_fallthru
      _
    %p124 = scmp.lt.s32.totalorder %s9, 2
    // Predicated region
    $region21: #{iwht2_branch.1} parent=5 // pred_check
      %p125 = pneg %p124
    $region22: #{iwht2_branch.1} parent=5 // pred_check_branch
      %127 = sbr.rel (%p125) target = $region24
    $region23: #{iwht2_branch.1} parent=5 // pred_region
      // Predicated region
      $region25: #{iwht2_branch.1} parent=23 // pred_check
        %p128 = pneg %p29
      $region26: #{iwht2_branch.1} parent=23 // pred_check_branch
        %130 = sbr.rel (%p128) target = $region28
      $region27: #{iwht2_branch.1} parent=23 // pred_region
        %s131 = smul.u32 2, %s9
        %p132 = scmp.lt.s32.totalorder %s131, 3
        %s133 = scalar_select %p132, %s131, 3
        %s134 = smul.addr %s133, 8
        %s135 = scalar_lea.vmem %s0, %s134
        %s136 = smul.u32 2, %s9
      $region28: #{iwht2_branch.1} parent=23 // pred_fallthru
        _
    $region24: #{iwht2_branch.1} parent=5 // pred_fallthru
      _
    %p137 = scmp.le.s32.totalorder 1, %s9
    %p138 = scmp.lt.s32.totalorder %s9, 3
    %p139 = pnand %p137, %p138
    %p140 = pneg %p139
    // Predicated region
    $region29: #{iwht2_branch.1} parent=5 // pred_check
      _
    $region30: #{iwht2_branch.1} parent=5 // pred_check_branch
      %142 = sbr.rel (%p139) target = $region32
    $region31: #{iwht2_branch.1} parent=5 // pred_region
      %s143 = ssub.s32 %s9, 1
      %s144 = smul.u32 2, %s14
      %p145 = scmp.lt.s32.totalorder %s144, 3
      %s146 = scalar_select %p145, %s144, 3
      %s147 = smul.addr %s146, 8
      %s148 = scalar_lea.vmem %s0, %s147
      %p149 = pneg %p35
      %p150 = pneg %p32
      %p151 = pneg %p56
      %p152 = pneg %p53
      %p153 = pneg %p77
      %p154 = pneg %p74
      %p155 = pneg %p103
      %p156 = pneg %p100
      %s157 = smul.u32 2, %s14
      %p158 = scmp.lt.s32.totalorder %s157, 3
      %s159 = scalar_select %p158, %s157, 3
      %s160 = smul.addr %s159, 8
      %s161 = scalar_lea.vmem %s3, %s160
      %s162 = smul.u32 2, %s14
      %p163 = scmp.lt.s32.totalorder %s162, 3
      %s164 = scalar_select %p163, %s162, 3
      %s165 = smul.addr %s164, 8
      %s166 = scalar_lea.vmem %s0, %s165
      %s167 = smul.u32 2, %s14
      %s168 = smul.u32 2, %s14
      %p169 = scmp.lt.s32.totalorder %s168, 3
      %s170 = scalar_select %p169, %s168, 3
      %s171 = smul.addr %s170, 8
      %s172 = scalar_lea.vmem %s3, %s171
      %s173 = smul.u32 2, %s14
      %v174 = vld [vmem:[%s166] sm:$0xff]
      %v175 = vld [vmem:[%s166 + $0x8] sm:$0xff]
      %v176 = vld [vmem:[%s1] sm:$0xff]
      %v177 = vld [vmem:[%s1 + $0x8] sm:$0xff]
      %v178 = vld [vmem:[%s1 + $0x10] sm:$0xff]
      %v179 = vld [vmem:[%s1 + $0x18] sm:$0xff]
      %v180 = vld [vmem:[%s1 + $0x20] sm:$0xff]
      %v181 = vld [vmem:[%s1 + $0x28] sm:$0xff]
      %v182 = vld [vmem:[%s1 + $0x30] sm:$0xff]
      %v183 = vld [vmem:[%s1 + $0x38] sm:$0xff]
      %v184 = vld [vmem:[%s1 + $0x40] sm:$0xff]
      %v185 = vld [vmem:[%s1 + $0x48] sm:$0xff]
      %v186 = vld [vmem:[%s1 + $0x50] sm:$0xff]
      %v187 = vld [vmem:[%s1 + $0x58] sm:$0xff]
      %v188 = vld [vmem:[%s1 + $0x60] sm:$0xff]
      %v189 = vld [vmem:[%s1 + $0x68] sm:$0xff]
      %v190 = vld [vmem:[%s1 + $0x70] sm:$0xff]
      %v191 = vld [vmem:[%s1 + $0x78] sm:$0xff]
      %v192 = vld [vmem:[%s2] sm:$0x1]
      %v194 = vlaneseq
      %v195 = vshrl.u32 %v194, 7
      %v196 = vsub.s32 0, %v195
      %v197 = vrot.slane %v192, %v196
      %199 = vmatprep.subr.mxu0 0.0
      %200 = vmatpush1.msra.mxu0 %v176
      %201 = vmatprep.subr.mxu0 0.0
      %202 = vmatpush1.msra.mxu0 %v177
      %203 = vmatprep.subr.mxu0 0.0
      %204 = vmatpush1.msra.mxu0 %v178
      %205 = vmatprep.subr.mxu0 0.0
      %206 = vmatpush1.msra.mxu0 %v179
      %207 = vmatprep.subr.mxu0 0.0
      %208 = vmatpush1.msra.mxu0 %v180
      %209 = vmatprep.subr.mxu0 0.0
      %210 = vmatpush1.msra.mxu0 %v181
      %211 = vmatprep.subr.mxu0 0.0
      %212 = vmatpush1.msra.mxu0 %v182
      %213 = vmatprep.subr.mxu0 0.0
      %214 = vmatpush1.msra.mxu0 %v183
      %215 = vmatprep.subr.mxu0 0.0
      %216 = vmatpush1.msra.mxu0 %v184
      %217 = vmatprep.subr.mxu0 0.0
      %218 = vmatpush1.msra.mxu0 %v185
      %219 = vmatprep.subr.mxu0 0.0
      %220 = vmatpush1.msra.mxu0 %v186
      %221 = vmatprep.subr.mxu0 0.0
      %222 = vmatpush1.msra.mxu0 %v187
      %223 = vmatprep.subr.mxu0 0.0
      %224 = vmatpush1.msra.mxu0 %v188
      %225 = vmatprep.subr.mxu0 0.0
      %226 = vmatpush1.msra.mxu0 %v189
      %227 = vmatprep.subr.mxu0 0.0
      %228 = vmatpush1.msra.mxu0 %v190
      %229 = vmatprep.subr.mxu0 0.0
      %230 = vmatpush1.msra.mxu0 %v191
      %231 = vmatprep.subr.mxu0 0.0
      %232 = vmatpush1.msra.mxu0 0.0
      %233 = vmatprep.subr.mxu0 0.0
      %234 = vmatpush1.msra.mxu0 0.0
      %235 = vmatprep.subr.mxu0 0.0
      %236 = vmatpush1.msra.mxu0 0.0
      %237 = vmatprep.subr.mxu0 0.0
      %238 = vmatpush1.msra.mxu0 0.0
      %239 = vmatprep.subr.mxu0 0.0
      %240 = vmatpush1.msra.mxu0 0.0
      %241 = vmatprep.subr.mxu0 0.0
      %242 = vmatpush1.msra.mxu0 0.0
      %243 = vmatprep.subr.mxu0 0.0
      %244 = vmatpush1.msra.mxu0 0.0
      %245 = vmatprep.subr.mxu0 0.0
      %246 = vmatpush1.msra.mxu0 0.0
      %247 = vmatprep.subr.mxu0 0.0
      %248 = vmatpush1.msra.mxu0 0.0
      %249 = vmatprep.subr.mxu0 0.0
      %250 = vmatpush1.msra.mxu0 0.0
      %251 = vmatprep.subr.mxu0 0.0
      %252 = vmatpush1.msra.mxu0 0.0
      %253 = vmatprep.subr.mxu0 0.0
      %254 = vmatpush1.msra.mxu0 0.0
      %255 = vmatprep.subr.mxu0 0.0
      %256 = vmatpush1.msra.mxu0 0.0
      %257 = vmatprep.subr.mxu0 0.0
      %258 = vmatpush1.msra.mxu0 0.0
      %259 = vmatprep.subr.mxu0 0.0
      %260 = vmatpush1.msra.mxu0 0.0
      %261 = vmatprep.subr.mxu0 0.0
      %262 = vmatpush1.msra.mxu0 0.0
      %263 = vmatprep.mubr.f32.mxu0 0.0
      %264 = vmatmul.mubr.f32.gmra.mrb[0].mxu0 %v174
      %v265 = vpop.f32.mrb[0].mxu0
      %v266 = vadd.f32 %v197, %v265
      %v267 = vpop.f32.mrb[0].mxu0
      %268 = vmatprep.mubr.f32.mxu0 0.0
      %269 = vmatmul.mubr.f32.gmra.mrb[0].mxu0 %v175
      %v270 = vpop.f32.mrb[0].mxu0
      %v271 = vadd.f32 %v197, %v270
      %v272 = vpop.f32.mrb[0].mxu0
      %273 = vdwg.mxu0
      %274 = vst [vmem:[%s172] sm:$0xff] %v266
      %275 = vst [vmem:[%s172 + $0x8] sm:$0xff] %v271
      %s276 = smul.u32 2, %s14
      %p277 = scmp.lt.s32.totalorder %s276, 3
      %s278 = scalar_select %p277, %s276, 3
      %s279 = smul.addr %s278, 8
      %s280 = scalar_lea.vmem %s3, %s279
      // Predicated region
      $region33: #{iwht2_branch.1} parent=31 // pred_check
        %p281 = pneg %p100
      $region34: #{iwht2_branch.1} parent=31 // pred_check_branch
        %283 = sbr.rel (%p281) target = $region36
      $region35: #{iwht2_branch.1} parent=31 // pred_region
        %s284 = smul.u32 2, %s14
      $region36: #{iwht2_branch.1} parent=31 // pred_fallthru
        _
    $region32: #{iwht2_branch.1} parent=5 // pred_fallthru
      _
    %p285 = scmp.le.s32.totalorder 2, %s9
    // Predicated region
    $region37: #{iwht2_branch.1} parent=5 // pred_check
      %p286 = pneg %p285
    $region38: #{iwht2_branch.1} parent=5 // pred_check_branch
      %288 = sbr.rel (%p286) target = $region40
    $region39: #{iwht2_branch.1} parent=5 // pred_region
      %s289 = ssub.s32 %s9, 2
      // Predicated region
      $region41: #{iwht2_branch.1} parent=39 // pred_check
        %p290 = pneg %p106
      $region42: #{iwht2_branch.1} parent=39 // pred_check_branch
        %292 = sbr.rel (%p290) target = $region44
      $region43: #{iwht2_branch.1} parent=39 // pred_region
        %s293 = smul.u32 2, %s15
        %p294 = scmp.lt.s32.totalorder %s293, 3
        %s295 = scalar_select %p294, %s293, 3
        %s296 = smul.addr %s295, 8
        %s297 = scalar_lea.vmem %s3, %s296
      $region44: #{iwht2_branch.1} parent=39 // pred_fallthru
        _
    $region40: #{iwht2_branch.1} parent=5 // pred_fallthru
      _
  $region6: #{iwht2_branch.1} parent=0 // loop_footer
    %s13 = sadd.s32 1, %s9
  $region7: #{iwht2_branch.1} parent=0 // loop_footer_branch
    %8 = sbr.rel target = $region3
  $region8: #{iwht2_branch.1} parent=0 // loop_exit
    _

</llo_original>
